<compile_context>
chip_gen: v7x
topology: tpu7x:2x2x1
jax: 0.10.0
libtpu: 0.0.40
codegen_flags: <defaults>
</compile_context>

<pallas_src>
import math
import jax
import jax.numpy as jnp
from jax.experimental import pallas as pl
from jax.experimental.pallas import tpu as pltpu


# ----------------------------------------------------------------------------
# Static structure derived from the irreps (parameter setup, plain JAX).
# irreps: list of (mul, l) groups, e.g. [(2, 0), (1, 1), (1, 2)]
# ----------------------------------------------------------------------------
def irreps_dim(irreps):
    return sum(mul * (2 * l + 1) for mul, l in irreps)


def build_wigner_z_statics(irreps, channels):
    """Returns (dim, freq_row, rev_rows).

    freq_row : (1, dim*channels) f32 — rotation frequency f_i repeated per channel
    rev_rows : python list of ints — rev_rows[i] is the source row for output row i
               (per-irrep-block index reversal), used for static slicing in-kernel.
    """
    freqs = []
    rev_rows = []
    off = 0
    for mul, l in irreps:
        size = 2 * l + 1
        for _ in range(mul):
            freqs.extend(range(l, -l - 1, -1))                 # f_i = l .. -l
            rev_rows.extend(off + size - 1 - i for i in range(size))
            off += size
    dim = off
    freq = jnp.asarray(freqs, dtype=jnp.float32)               # (dim,)
    freq_row = jnp.repeat(freq, channels).reshape(1, dim * channels)
    return dim, freq_row, rev_rows


# ----------------------------------------------------------------------------
# Pallas kernel: a tile of TB batch elements per grid step, purely elementwise.
# ----------------------------------------------------------------------------
def _make_kernel(rev_rows, channels):
    C = channels

    def kernel(angle_ref, freq_ref, x_ref, o_ref):
        a = angle_ref[...]                        # (TB, 1)
        f = freq_ref[...]                         # (1, dim*C)
        x = x_ref[...].astype(jnp.float32)        # (TB, dim*C)
        phase = a * f                             # (TB, dim*C)  VPU broadcast-mul
        c = jnp.cos(phase)                        # EUP
        s = jnp.sin(phase)                        # EUP
        # Static per-irrep-block row reversal: lane slices (C wide) + concat.
        x_rev = jnp.concatenate(
            [x[:, j * C:(j + 1) * C] for j in rev_rows], axis=1)
        o_ref[...] = (c * x + s * x_rev).astype(o_ref.dtype)

    return kernel


def wigner_rotate_z(x, angle, irreps, *, block_batch=None):
    """x: (B, dim, C) float32, angle: (B,) float32 -> (B, dim, C)."""
    B, dim, C = x.shape
    dim_chk, freq_row, rev_rows = build_wigner_z_statics(irreps, C)
    assert dim == dim_chk
    dimC = dim * C

    x2 = x.reshape(B, dimC)                        # free (row-major) reshape
    angle2 = angle.astype(jnp.float32).reshape(B, 1)

    if block_batch is None:
        # ~2 MiB of x per block (hides per-step overhead), comfortably within
        # the scoped VMEM budget even on v7x (64 MiB total).
        tb = max(1, (2 * 1024 * 1024) // (dimC * 4))
        if B >= 16:
            tb = min(tb, -(-B // 2))               # keep >= 2 grid steps (v7x: 2 TCs)
        if tb >= B:
            tb = B                                 # single full block
        else:
            tb = max(8, (tb // 8) * 8)             # sublane-aligned partial blocks
    else:
        tb = block_batch

    grid = (pl.cdiv(B, tb),)

    out2 = pl.pallas_call(
        _make_kernel(rev_rows, C),
        out_shape=jax.ShapeDtypeStruct((B, dimC), x.dtype),
        grid_spec=pltpu.PrefetchScalarGridSpec(
            num_scalar_prefetch=0,
            grid=grid,
            in_specs=[
                pl.BlockSpec((tb, 1), lambda b: (b, 0)),       # angle tile
                pl.BlockSpec((1, dimC), lambda b: (0, 0)),     # static freq row
                pl.BlockSpec((tb, dimC), lambda b: (b, 0)),    # x tile (lane-dense)
            ],
            out_specs=pl.BlockSpec((tb, dimC), lambda b: (b, 0)),
        ),
        compiler_params=pltpu.CompilerParams(
            dimension_semantics=("parallel",),
            vmem_limit_bytes=64 * 1024 * 1024,
        ),
    )(angle2, freq_row, x2)
    return out2.reshape(B, dim, C)


# ----------------------------------------------------------------------------
# Pure-JAX reference (literal port of e3nn's _z_rot_mat + block-diag + D @ x).
# ----------------------------------------------------------------------------
def ref_wigner_rotate_z(x, angle, irreps):
    B = angle.shape[0]
    dim = irreps_dim(irreps)
    D = jnp.zeros((B, dim, dim), dtype=jnp.float32)
    off = 0
    for mul, l in irreps:
        size = 2 * l + 1
        freqs = jnp.arange(l, -l - 1, -1, dtype=jnp.float32)
        phase = freqs[None, :] * angle[:, None]
        inds = jnp.arange(size)
        rev = size - 1 - inds
        M = jnp.zeros((B, size, size), dtype=jnp.float32)
        M = M.at[:, inds, rev].set(jnp.sin(phase))   # anti-diagonal: sin
        M = M.at[:, inds, inds].set(jnp.cos(phase))  # diagonal: cos (overwrites center)
        for _ in range(mul):
            D = D.at[:, off:off + size, off:off + size].set(M)
            off += size
    return jnp.einsum("bij,bjc->bic", D, x)


if __name__ == "__main__":
    # irreps = "2x0e + 1x1o + 1x2e"  ->  dim = 2*1 + 3 + 5 = 10
    irreps = [(2, 0), (1, 1), (1, 2)]
    B, C = 2, 8
    dim = irreps_dim(irreps)

    key = jax.random.PRNGKey(0)
    kx, ka = jax.random.split(key)
    x = jax.random.normal(kx, (B, dim, C), dtype=jnp.float32)
    angle = jax.random.uniform(ka, (B,), dtype=jnp.float32) * 2.0 * math.pi

    out = wigner_rotate_z(x, angle, irreps)
    out = jax.block_until_ready(out)

    ref = ref_wigner_rotate_z(x, angle, irreps)
    assert out.shape == (B, dim, C)
    assert jnp.allclose(out, ref, rtol=1e-5, atol=1e-5), "mismatch vs reference"

    print("KERNEL_OK")
</pallas_src>

<mosaic_0001>
module attributes {stable_mosaic.version = 11 : i64} {
  func.func @kernel(%arg0: i32, %arg1: memref<2x1xf32, #tpu.memory_space<vmem>>, %arg2: memref<1x80xf32, #tpu.memory_space<vmem>>, %arg3: memref<2x80xf32, #tpu.memory_space<vmem>>, %arg4: memref<2x80xf32, #tpu.memory_space<vmem>>) attributes {dimension_semantics = [#tpu.dimension_semantics<parallel>], iteration_bounds = array<i64: 1>, scalar_prefetch = 0 : i64, scratch_operands = 0 : i64, tpu.core_type = #tpu.core_type<tc>, window_params = [{transform_indices = @transform_0, window_bounds = array<i64: 2, 1>}, {pipeline_mode = #tpu.pipeline_mode<synchronous>, transform_indices = @transform_1, window_bounds = array<i64: 1, 80>}, {transform_indices = @transform_2, window_bounds = array<i64: 2, 80>}, {transform_indices = @transform_3, window_bounds = array<i64: 2, 80>}]} {
    %c0 = arith.constant 0 : index
    %c0_0 = arith.constant 0 : index
    %0 = vector.load %arg1[%c0, %c0_0] : memref<2x1xf32, #tpu.memory_space<vmem>>, vector<2x1xf32>
    %c0_1 = arith.constant 0 : index
    %c0_2 = arith.constant 0 : index
    %1 = vector.load %arg2[%c0_1, %c0_2] : memref<1x80xf32, #tpu.memory_space<vmem>>, vector<1x80xf32>
    %c0_3 = arith.constant 0 : index
    %c0_4 = arith.constant 0 : index
    %2 = vector.load %arg3[%c0_3, %c0_4] : memref<2x80xf32, #tpu.memory_space<vmem>>, vector<2x80xf32>
    %3 = vector.broadcast %0 : vector<2x1xf32> to vector<2x80xf32>
    %4 = vector.broadcast %1 : vector<1x80xf32> to vector<2x80xf32>
    %5 = arith.mulf %3, %4 : vector<2x80xf32>
    %6 = math.cos %5 : vector<2x80xf32>
    %7 = math.sin %5 : vector<2x80xf32>
    %8 = vector.extract_strided_slice %2 {offsets = [0, 0], sizes = [2, 8], strides = [1, 1]} : vector<2x80xf32> to vector<2x8xf32>
    %9 = vector.extract_strided_slice %2 {offsets = [0, 8], sizes = [2, 8], strides = [1, 1]} : vector<2x80xf32> to vector<2x8xf32>
    %10 = vector.extract_strided_slice %2 {offsets = [0, 32], sizes = [2, 8], strides = [1, 1]} : vector<2x80xf32> to vector<2x8xf32>
    %11 = vector.extract_strided_slice %2 {offsets = [0, 24], sizes = [2, 8], strides = [1, 1]} : vector<2x80xf32> to vector<2x8xf32>
    %12 = vector.extract_strided_slice %2 {offsets = [0, 16], sizes = [2, 8], strides = [1, 1]} : vector<2x80xf32> to vector<2x8xf32>
    %13 = vector.extract_strided_slice %2 {offsets = [0, 72], sizes = [2, 8], strides = [1, 1]} : vector<2x80xf32> to vector<2x8xf32>
    %14 = vector.extract_strided_slice %2 {offsets = [0, 64], sizes = [2, 8], strides = [1, 1]} : vector<2x80xf32> to vector<2x8xf32>
    %15 = vector.extract_strided_slice %2 {offsets = [0, 56], sizes = [2, 8], strides = [1, 1]} : vector<2x80xf32> to vector<2x8xf32>
    %16 = vector.extract_strided_slice %2 {offsets = [0, 48], sizes = [2, 8], strides = [1, 1]} : vector<2x80xf32> to vector<2x8xf32>
    %17 = vector.extract_strided_slice %2 {offsets = [0, 40], sizes = [2, 8], strides = [1, 1]} : vector<2x80xf32> to vector<2x8xf32>
    %18 = tpu.concatenate %8, %9, %10, %11, %12, %13, %14, %15, %16, %17 in 1 : vector<2x8xf32>, vector<2x8xf32>, vector<2x8xf32>, vector<2x8xf32>, vector<2x8xf32>, vector<2x8xf32>, vector<2x8xf32>, vector<2x8xf32>, vector<2x8xf32>, vector<2x8xf32> -> vector<2x80xf32>
    %19 = arith.mulf %6, %2 : vector<2x80xf32>
    %20 = arith.mulf %7, %18 : vector<2x80xf32>
    %21 = arith.addf %19, %20 : vector<2x80xf32>
    %c0_5 = arith.constant 0 : index
    %c0_6 = arith.constant 0 : index
    %22 = vector.load %arg4[%c0_5, %c0_6] : memref<2x80xf32, #tpu.memory_space<vmem>>, vector<2x80xf32>
    tpu.vector_store %arg4[%c0_5, %c0_6], %21 {strides = array<i32>} : memref<2x80xf32, #tpu.memory_space<vmem>>, vector<2x80xf32>,
    return
  }
  func.func @transform_0(%arg0: i32) -> (i32, i32) {
    %c0_i32 = arith.constant 0 : i32
    %c0_i32_0 = arith.constant 0 : i32
    return %arg0, %c0_i32 : i32, i32
  }
  func.func @transform_1(%arg0: i32) -> (i32, i32) {
    %c0_i32 = arith.constant 0 : i32
    %c0_i32_0 = arith.constant 0 : i32
    %c0_i32_1 = arith.constant 0 : i32
    return %c0_i32, %c0_i32_0 : i32, i32
  }
  func.func @transform_2(%arg0: i32) -> (i32, i32) {
    %c0_i32 = arith.constant 0 : i32
    %c0_i32_0 = arith.constant 0 : i32
    return %arg0, %c0_i32 : i32, i32
  }
  func.func @transform_3(%arg0: i32) -> (i32, i32) {
    %c0_i32 = arith.constant 0 : i32
    %c0_i32_0 = arith.constant 0 : i32
    return %arg0, %c0_i32 : i32, i32
  }
}

</mosaic_0001>

<llo_original>
// kernel: tpu_custom_call.1
$region0: #{tpu_custom_call.1}
  #allocation0 [shape = 'u32[]', space=smem, size = 0x4, offset = 0x4, fixed_abs, tag = 'smem constant byte address 0x4 - core index']
  #allocation1 [shape = 'u32[144,128]{1,0:T(1,128)}', space=vmem, size = 0x12000, scoped, tag = 'internal scratch']
  %s0 = inlined_call_operand.hbm [shape: f32[2,1], index: 0, kind: input, shape index: {}]
  %s1 = inlined_call_operand.hbm [shape: f32[1,80], index: 1, kind: input, shape index: {}]
  %s2 = inlined_call_operand.hbm [shape: f32[2,80], index: 2, kind: input, shape index: {}]
  %s3 = inlined_call_operand.hbm [shape: f32[2,80], index: 3, kind: output, shape index: {}]
  %s4 = sld [smem:[#allocation0]]
  $region34: #{tpu_custom_call.1} parent=0
    _
  %s6 = ssub.s32 1, %s4
  %s7 = scalar_select 0, %s6, %s4
  $region1: #{tpu_custom_call.1} parent=0
    #allocation2 [shape = 'u8[1024]{0}', space=vmem, size = 0x400, scoped, tag = 'input window, operand 0, single buffered']
    #allocation3 [shape = 's32[1]{0}', space=sflag, size = 0x4, scoped, tag = 'scoped memory for tpu_custom_call.1']
    #allocation4 [shape = 's32[1]{0}', space=sflag, size = 0x4, scoped, tag = 'scoped memory for tpu_custom_call.1']
    #allocation5 [shape = 'u8[512]{0}', space=vmem, size = 0x400, scoped, tag = 'input window, operand 1, single buffered']
    #allocation6 [shape = 's32[1]{0}', space=sflag, size = 0x4, scoped, tag = 'scoped memory for tpu_custom_call.1']
    #allocation7 [shape = 'u8[1024]{0}', space=vmem, size = 0x400, scoped, tag = 'input window, operand 2, single buffered']
    #allocation8 [shape = 'u8[1024]{0}', space=vmem, size = 0x400, scoped, tag = 'output window, operand 0, single buffered']
    %8 = vsyncpa [#allocation3], 0
    %9 = vsyncpa [#allocation6], 0
    %10 = vsyncpa [#allocation4], 0
    // Predicated region
    $region2: #{tpu_custom_call.1} parent=1 // pred_check
      _
    $region3: #{tpu_custom_call.1} parent=1 // pred_check_branch
      %12 = sbr.rel (0) target = $region5
    $region4: #{tpu_custom_call.1} parent=1 // pred_region
      %s14 = ssub.s32 32, 32
      %15 = vsyncadd [#allocation3], %s14
      %s17 = sshll.u32 [#allocation2], 4
      %s18 = int_to_ptr.vmem [resolvable:$true] %s17
      %20 = dma.hbm_to_vmem [thread:$0]  %s0, 32, %s18, [#allocation3]
    $region5: #{tpu_custom_call.1} parent=1 // pred_fallthru
      _
    // Predicated region
    $region6: #{tpu_custom_call.1} parent=1 // pred_check
      _
    $region7: #{tpu_custom_call.1} parent=1 // pred_check_branch
      %22 = sbr.rel (0) target = $region9
    $region8: #{tpu_custom_call.1} parent=1 // pred_region
      %s24 = ssub.s32 16, 16
      %25 = vsyncadd [#allocation6], %s24
      %s27 = sshll.u32 [#allocation5], 4
      %s28 = int_to_ptr.vmem [resolvable:$true] %s27
      %30 = dma.hbm_to_vmem [thread:$0]  %s1, 16, %s28, [#allocation6]
    $region9: #{tpu_custom_call.1} parent=1 // pred_fallthru
      _
    // Predicated region
    $region10: #{tpu_custom_call.1} parent=1 // pred_check
      _
    $region11: #{tpu_custom_call.1} parent=1 // pred_check_branch
      %32 = sbr.rel (0) target = $region13
    $region12: #{tpu_custom_call.1} parent=1 // pred_region
      %s34 = ssub.s32 32, 32
      %35 = vsyncadd [#allocation6], %s34
      %s37 = sshll.u32 [#allocation7], 4
      %s38 = int_to_ptr.vmem [resolvable:$true] %s37
      %40 = dma.hbm_to_vmem [thread:$0]  %s2, 32, %s38, [#allocation6]
    $region13: #{tpu_custom_call.1} parent=1 // pred_fallthru
      _
    // Predicated region
    $region14: #{tpu_custom_call.1} parent=1 // pred_check
      _
    $region15: #{tpu_custom_call.1} parent=1 // pred_check_branch
      %42 = sbr.rel (0) target = $region17
    $region16: #{tpu_custom_call.1} parent=1 // pred_region
      %43 = dma.done [#allocation3], 32
    $region17: #{tpu_custom_call.1} parent=1 // pred_fallthru
      _
    // Predicated region
    $region18: #{tpu_custom_call.1} parent=1 // pred_check
      _
    $region19: #{tpu_custom_call.1} parent=1 // pred_check_branch
      %45 = sbr.rel (0) target = $region21
    $region20: #{tpu_custom_call.1} parent=1 // pred_region
      %46 = dma.done [#allocation6], 16
    $region21: #{tpu_custom_call.1} parent=1 // pred_fallthru
      _
    // Predicated region
    $region22: #{tpu_custom_call.1} parent=1 // pred_check
      _
    $region23: #{tpu_custom_call.1} parent=1 // pred_check_branch
      %48 = sbr.rel (0) target = $region25
    $region24: #{tpu_custom_call.1} parent=1 // pred_region
      %49 = dma.done [#allocation6], 32
    $region25: #{tpu_custom_call.1} parent=1 // pred_fallthru
      _
    %v50 = vld [vmem:[#allocation2] sm:$0x3]
    %v51 = vld [vmem:[#allocation5] sm:$0x1]
    %v52 = vld [vmem:[#allocation7] sm:$0x3]
    %54 = vset.pattern.permute.xlu0 0
    %55 = vperm.xlu0 %54, %v50
    %v56 = vpop.permute.xlu0 %55
    %v59 = vlaneseq
    %v60 = vshrl.u32 %v59, 7
    %v61 = vsub.s32 0, %v60
    %v62 = vrot.slane %v51, %v61
    %v64 = vmul.f32 %v56, %v62
    %v65 = vand.u32 2147483647, %v64
    %vm66 = vcmp.le.f32.partialorder %v65, 0.7853982
    %vm67 = vcmp.lt.s32.totalorder %v64, 0
    %v68 = vand.u32 %v64, 2139095040
    %v69 = vshrl.u32 %v68, 23
    %v70 = vsub.s32 %v69, 127
    %v71 = vand.u32 2147483647, %v64
    %v72 = vand.u32 %v71, 8388607
    %v73 = vor.u32 %v72, 8388608
    %v74 = vsub.s32 0, %v73
    %v75 = vadd.s32 %v70, 1
    %vm76 = vcmp.gt.s32.totalorder %v75, 0
    %v77 = vsel %vm76, %v75, 0
    %v78 = vshrl.u32 %v77, 5
    %v79 = vand.u32 %v77, 31
    %v80 = vsub.s32 32, %v79
    %v81 = vshrl.u32 683565275, %v80
    %v82 = vshll.u32 683565275, %v79
    %v83 = vshrl.u32 2475754826, %v80
    %v84 = vor.u32 %v82, %v83
    %v85 = vshll.u32 2475754826, %v79
    %v86 = vshrl.u32 2131351028, %v80
    %v87 = vor.u32 %v85, %v86
    %v88 = vshll.u32 2131351028, %v79
    %v89 = vshrl.u32 2102212464, %v80
    %v90 = vor.u32 %v88, %v89
    %v91 = vshll.u32 2102212464, %v79
    %v92 = vshrl.u32 920167782, %v80
    %v93 = vor.u32 %v91, %v92
    %v94 = vshll.u32 920167782, %v79
    %v95 = vshrl.u32 1326507024, %v80
    %v96 = vor.u32 %v94, %v95
    %vm97 = vcmp.lt.s32.totalorder %v78, 1
    %vm98 = vcmp.lt.s32.totalorder %v78, 2
    %vm99 = vcmp.lt.s32.totalorder %v78, 3
    %vm100 = vcmp.lt.s32.totalorder %v78, 4
    %v101 = vsel %vm97, %v81, %v84
    %v102 = vsel %vm100, %v90, 2102212464
    %v103 = vsel %vm99, %v87, %v102
    %v104 = vsel %vm98, %v101, %v103
    %v105 = vsel %vm97, %v84, %v87
    %v106 = vsel %vm100, %v93, 920167782
    %v107 = vsel %vm99, %v90, %v106
    %v108 = vsel %vm98, %v105, %v107
    %v109 = vsel %vm97, %v87, %v90
    %v110 = vsel %vm100, %v96, 1326507024
    %v111 = vsel %vm99, %v93, %v110
    %v112 = vsel %vm98, %v109, %v111
    %v113 = vshll.u32 %v73, 8
    %v114 = vmul.u32.u64.compose %v113, %v112
    %v115 = vextract.low.u32 %v114
    %v116 = vextract.high.u32 %v114
    %v117 = vmul.u32.u64.compose %v113, %v108
    %v118 = vextract.low.u32 %v117
    %v119 = vextract.high.u32 %v117
    %v120 = vmul.u32 %v113, %v104
    %v121 = vadd.s32 %v116, %v118
    %vm122 = vc.u32 %v116, %v118
    %v123 = vadd.s32 %v119, 1
    %v124 = vsel %vm122, %v123, %v119
    %v125 = vadd.s32 %v120, %v124
    %v126 = vadd.s32 %v125, 536870912
    %v127 = vshrl.u32 %v126, 30
    %v128 = vshll.u32 %v127, 30
    %v129 = vsub.s32 %v125, %v128
    %vm130 = vcmp.lt.s32.totalorder %v129, 0
    %v131 = vsub.s32 0, %v129
    %v132 = vsel %vm130, %v131, %v129
    %v133 = vclz %v132
    %v134 = vsub.s32 %v133, 2
    %vm135 = vcmp.gt.s32.totalorder 0, %v134
    %v136 = vsel %vm135, 0, %v134
    %v137 = vsub.s32 32, %v136
    %v138 = vshll.u32 %v129, %v136
    %v139 = vshrl.u32 %v121, %v137
    %v140 = vor.u32 %v138, %v139
    %v141 = vsub.s32 4294967266, %v136
    %v142 = vadd.s32 %v141, 127
    %v143 = vshll.u32 %v142, 23
    %v144 = vor.u32 4788187, %v143
    %v145 = vand.u32 2147483647, %v144
    %v147 = vcvt.s32.f32 %v140
    %v148 = vmul.f32 %v147, %v145
    %v149 = vxor.u32 %v148, 2147483648
    %v150 = vsel %vm67, %v149, %v148
    %v151 = vsub.s32 4, %v127
    %v152 = vsel %vm67, %v151, %v127
    %v153 = vsel %vm66, %v64, %v150
    %v154 = vsel %vm66, 0, %v152
    %v155 = vcosq.f32.pop %v153
    %v156 = vsinq.f32.pop %v153
    %vm157 = vweird.f32 %v64
    %v158 = vand.u32 %v154, 3
    %vm159 = vcmp.lt.s32.totalorder %v158, 2
    %vm160 = vcmp.eq.s32.totalorder %v158, 0
    %v161 = vxor.u32 %v156, 2147483648
    %v162 = vsel %vm160, %v155, %v161
    %vm163 = vcmp.eq.s32.totalorder %v158, 2
    %v164 = vxor.u32 %v155, 2147483648
    %v165 = vsel %vm163, %v164, %v156
    %v166 = vsel %vm159, %v162, %v165
    %v167 = vsel %vm157, nan, %v166
    %v168 = vand.u32 2147483647, %v64
    %vm169 = vcmp.le.f32.partialorder %v168, 0.7853982
    %vm170 = vcmp.lt.s32.totalorder %v64, 0
    %v171 = vand.u32 %v64, 2139095040
    %v172 = vshrl.u32 %v171, 23
    %v173 = vsub.s32 %v172, 127
    %v174 = vand.u32 2147483647, %v64
    %v175 = vand.u32 %v174, 8388607
    %v176 = vor.u32 %v175, 8388608
    %v177 = vsub.s32 0, %v176
    %v178 = vadd.s32 %v173, 1
    %vm179 = vcmp.gt.s32.totalorder %v178, 0
    %v180 = vsel %vm179, %v178, 0
    %v181 = vshrl.u32 %v180, 5
    %v182 = vand.u32 %v180, 31
    %v183 = vsub.s32 32, %v182
    %v184 = vshrl.u32 683565275, %v183
    %v185 = vshll.u32 683565275, %v182
    %v186 = vshrl.u32 2475754826, %v183
    %v187 = vor.u32 %v185, %v186
    %v188 = vshll.u32 2475754826, %v182
    %v189 = vshrl.u32 2131351028, %v183
    %v190 = vor.u32 %v188, %v189
    %v191 = vshll.u32 2131351028, %v182
    %v192 = vshrl.u32 2102212464, %v183
    %v193 = vor.u32 %v191, %v192
    %v194 = vshll.u32 2102212464, %v182
    %v195 = vshrl.u32 920167782, %v183
    %v196 = vor.u32 %v194, %v195
    %v197 = vshll.u32 920167782, %v182
    %v198 = vshrl.u32 1326507024, %v183
    %v199 = vor.u32 %v197, %v198
    %vm200 = vcmp.lt.s32.totalorder %v181, 1
    %vm201 = vcmp.lt.s32.totalorder %v181, 2
    %vm202 = vcmp.lt.s32.totalorder %v181, 3
    %vm203 = vcmp.lt.s32.totalorder %v181, 4
    %v204 = vsel %vm200, %v184, %v187
    %v205 = vsel %vm203, %v193, 2102212464
    %v206 = vsel %vm202, %v190, %v205
    %v207 = vsel %vm201, %v204, %v206
    %v208 = vsel %vm200, %v187, %v190
    %v209 = vsel %vm203, %v196, 920167782
    %v210 = vsel %vm202, %v193, %v209
    %v211 = vsel %vm201, %v208, %v210
    %v212 = vsel %vm200, %v190, %v193
    %v213 = vsel %vm203, %v199, 1326507024
    %v214 = vsel %vm202, %v196, %v213
    %v215 = vsel %vm201, %v212, %v214
    %v216 = vshll.u32 %v176, 8
    %v217 = vmul.u32.u64.compose %v216, %v215
    %v218 = vextract.low.u32 %v217
    %v219 = vextract.high.u32 %v217
    %v220 = vmul.u32.u64.compose %v216, %v211
    %v221 = vextract.low.u32 %v220
    %v222 = vextract.high.u32 %v220
    %v223 = vmul.u32 %v216, %v207
    %v224 = vadd.s32 %v219, %v221
    %vm225 = vc.u32 %v219, %v221
    %v226 = vadd.s32 %v222, 1
    %v227 = vsel %vm225, %v226, %v222
    %v228 = vadd.s32 %v223, %v227
    %v229 = vadd.s32 %v228, 536870912
    %v230 = vshrl.u32 %v229, 30
    %v231 = vshll.u32 %v230, 30
    %v232 = vsub.s32 %v228, %v231
    %vm233 = vcmp.lt.s32.totalorder %v232, 0
    %v234 = vsub.s32 0, %v232
    %v235 = vsel %vm233, %v234, %v232
    %v236 = vclz %v235
    %v237 = vsub.s32 %v236, 2
    %vm238 = vcmp.gt.s32.totalorder 0, %v237
    %v239 = vsel %vm238, 0, %v237
    %v240 = vsub.s32 32, %v239
    %v241 = vshll.u32 %v232, %v239
    %v242 = vshrl.u32 %v224, %v240
    %v243 = vor.u32 %v241, %v242
    %v244 = vsub.s32 4294967266, %v239
    %v245 = vadd.s32 %v244, 127
    %v246 = vshll.u32 %v245, 23
    %v247 = vor.u32 4788187, %v246
    %v248 = vand.u32 2147483647, %v247
    %v250 = vcvt.s32.f32 %v243
    %v251 = vmul.f32 %v250, %v248
    %v252 = vxor.u32 %v251, 2147483648
    %v253 = vsel %vm170, %v252, %v251
    %v254 = vsub.s32 4, %v230
    %v255 = vsel %vm170, %v254, %v230
    %v256 = vsel %vm169, %v64, %v253
    %v257 = vsel %vm169, 0, %v255
    %v258 = vcosq.f32.pop %v256
    %v259 = vsinq.f32.pop %v256
    %vm260 = vweird.f32 %v64
    %v261 = vadd.s32 %v257, 3
    %v262 = vand.u32 %v261, 3
    %vm263 = vcmp.lt.s32.totalorder %v262, 2
    %vm264 = vcmp.eq.s32.totalorder %v262, 0
    %v265 = vxor.u32 %v259, 2147483648
    %v266 = vsel %vm264, %v258, %v265
    %vm267 = vcmp.eq.s32.totalorder %v262, 2
    %v268 = vxor.u32 %v258, 2147483648
    %v269 = vsel %vm267, %v268, %v259
    %v270 = vsel %vm263, %v266, %v269
    %v271 = vsel %vm260, nan, %v270
    %273 = vrot.lane.b32.xlu0 %v52, 112
    %v274 = vpop.permute.xlu0 %273
    %276 = vrot.lane.b32.xlu0 %v52, 16
    %v277 = vpop.permute.xlu0 %276
    %279 = vrot.lane.b32.xlu0 %v52, 96
    %v280 = vpop.permute.xlu0 %279
    %282 = vrot.lane.b32.xlu0 %v52, 32
    %v283 = vpop.permute.xlu0 %282
    %vm285 = vcmask 130048
    %v286 = vsel %vm285, %v52, %v274
    %vm287 = vcmask 195584
    %v288 = vsel %vm287, %v286, %v52
    %vm289 = vcmask 261120
    %v290 = vsel %vm289, %v288, %v277
    %vm291 = vcmask 326656
    %v292 = vsel %vm291, %v290, %v280
    %vm293 = vcmask 392192
    %v294 = vsel %vm293, %v292, %v274
    %vm295 = vcmask 457728
    %v296 = vsel %vm295, %v294, %v52
    %vm297 = vcmask 523264
    %v298 = vsel %vm297, %v296, %v277
    %vm299 = vcmask 588800
    %v300 = vsel %vm299, %v298, %v283
    %v301 = vmul.f32 %v167, %v52
    %v302 = vmul.f32 %v271, %v300
    %v303 = vadd.f32 %v301, %v302
    %vm304 = vcmask 648192
    %305 = vst.msk [vmem:[#allocation8] sm:$0x3] %vm304, %v303
    // Predicated region
    $region26: #{tpu_custom_call.1} parent=1 // pred_check
      _
    $region27: #{tpu_custom_call.1} parent=1 // pred_check_branch
      %307 = sbr.rel (0) target = $region29
    $region28: #{tpu_custom_call.1} parent=1 // pred_region
      %s309 = ssub.s32 32, 32
      %310 = vsyncadd [#allocation4], %s309
      %s312 = sshll.u32 [#allocation8], 4
      %s313 = int_to_ptr.vmem [resolvable:$true] %s312
      %315 = dma.vmem_to_hbm [thread:$0]  %s313, 32, %s3, [#allocation4]
    $region29: #{tpu_custom_call.1} parent=1 // pred_fallthru
      _
    // Predicated region
    $region30: #{tpu_custom_call.1} parent=1 // pred_check
      _
    $region31: #{tpu_custom_call.1} parent=1 // pred_check_branch
      %317 = sbr.rel (0) target = $region33
    $region32: #{tpu_custom_call.1} parent=1 // pred_region
      %318 = dma.done [#allocation4], 32
    $region33: #{tpu_custom_call.1} parent=1 // pred_fallthru
      _
    %319 = vsyncpa [#allocation3], 1
    %320 = vsyncpa [#allocation6], 1
    %321 = vsyncpa [#allocation4], 1

</llo_original>
